<compile_context>
chip_gen: v7x
topology: tpu7x:2x2x1
jax: 0.10.0
libtpu: 0.0.40
codegen_flags: <defaults>
</compile_context>

<pallas_src>
import functools

import jax
import jax.numpy as jnp
from jax import lax
from jax.experimental import pallas as pl
from jax.experimental.pallas import tpu as pltpu


def _round_up(x, m):
    return ((x + m - 1) // m) * m


# Sentinel coordinate for padded points: distances involving one padded point
# are ~3e36 (finite, never the min for a real point); pad-pad distances are 0
# but padded rows/cols are excluded from the loss sums anyway.
_PAD_COORD = 1.0e18
_BIG = float(jnp.finfo(jnp.float32).max)


def _chamfer_kernel(p1_ref, p2t_ref, out_ref,
                    rowmin_s, colmin_s, loss1_v, loss2_v,
                    *, w1, w2, n_true, m_true, tn, tm, chunks, pad_n, pad_m):
    n = pl.program_id(1)
    m = pl.program_id(2)
    n_last = pl.num_programs(1) - 1
    m_last = pl.num_programs(2) - 1
    first_n = n == 0
    first_m = m == 0

    # ---- per-batch accumulator init (first grid step of this batch) ---------
    @pl.when(jnp.logical_and(first_n, first_m))
    def _():
        loss1_v[...] = jnp.zeros_like(loss1_v)
        loss2_v[...] = jnp.zeros_like(loss2_v)

    p1 = p1_ref[0].astype(jnp.float32)          # (tn, 3)
    p2 = p2t_ref[0].astype(jnp.float32)         # (3, tm), lane-dense
    x1 = p1[:, 0:1]                             # (tn, 1) coordinate columns
    y1 = p1[:, 1:2]
    z1 = p1[:, 2:3]

    # ---- distances, streamed over 512-lane chunks of this m-tile ------------
    # Exact VPU form sum_c (a_c - b_c)^2: no MXU, no cancellation, and live
    # (tn, chunk) temporaries stay ~1 MiB regardless of tm.
    row_part = None                             # (tn, 128) per-lane row-min partial
    for off, clen in chunks:
        p2c = p2[:, off:off + clen]             # (3, clen)
        dx = x1 - p2c[0:1, :]                   # broadcast (tn,1)-(1,clen)
        dy = y1 - p2c[1:2, :]
        dz = z1 - p2c[2:3, :]
        d = dx * dx + dy * dy + dz * dz         # (tn, clen) squared distances

        # points2 side: min over this n-tile's rows, running-min across n.
        cmin = jnp.min(d, axis=0, keepdims=True)                     # (1, clen)
        prev = jnp.where(first_n, _BIG, colmin_s[m, :, off:off + clen])
        colmin_s[m, :, off:off + clen] = jnp.minimum(prev, cmin)

        # points1 side: fold 128-lane groups elementwise (VPU only); the
        # cross-lane XLU reduce is deferred to m == m_last.
        rp = d[:, 0:128]
        for g in range(1, clen // 128):
            rp = jnp.minimum(rp, d[:, g * 128:(g + 1) * 128])
        row_part = rp if row_part is None else jnp.minimum(row_part, rp)

    prev_row = jnp.where(first_m, _BIG, rowmin_s[...])
    rowmin_s[...] = jnp.minimum(prev_row, row_part)

    # ---- fold finished rows into the per-batch loss1 sum (once per n-tile) --
    @pl.when(m == m_last)
    def _():
        d1 = jnp.min(rowmin_s[...], axis=1, keepdims=True)           # (tn, 1)
        if pad_n:
            row = n * tn + lax.broadcasted_iota(jnp.int32, (tn, 1), 0)
            d1 = jnp.where(row < n_true, d1, 0.0)
        loss1_v[...] = loss1_v[...] + jnp.sum(d1, axis=0, keepdims=True)

    # ---- fold finished columns into the per-batch loss2 sum -----------------
    @pl.when(n == n_last)
    def _():
        d2 = colmin_s[m]                                             # (1, tm)
        if pad_m:
            col = m * tm + lax.broadcasted_iota(jnp.int32, (1, tm), 1)
            d2 = jnp.where(col < m_true, d2, 0.0)
        loss2_v[...] = loss2_v[...] + jnp.sum(d2, axis=1, keepdims=True)

    # ---- finalize per-batch loss --------------------------------------------
    @pl.when(jnp.logical_and(n == n_last, m == m_last))
    def _():
        loss = (w1 / n_true) * loss1_v[...] + (w2 / m_true) * loss2_v[...]
        out_ref[...] = loss.reshape(1, 1, 1).astype(out_ref.dtype)


def chamfer_distance_loss(points1, points2, w1=1.0, w2=1.0, each_batch=False,
                          *, n_tile_cap=512, m_tile_cap=2048):
    # check_parameters equivalents.
    assert points1.ndim == 3 and points1.shape[-1] == 3
    assert points2.ndim == 3 and points2.shape[-1] == 3
    assert points1.shape[0] == points2.shape[0]

    b, n, _ = points1.shape
    m = points2.shape[1]

    # Tile sizes: TN multiple of 8 (f32 sublane), TM multiple of 128 (lane).
    # Default caps 512 / 2048 amortize the ~0.35 us per-grid-step overhead;
    # VMEM stays well under 32 MiB on every generation (incl. v7x) because the
    # kernel chunks the M axis internally instead of materializing (TN, TM).
    nt = pl.cdiv(n, n_tile_cap)
    tn = _round_up(pl.cdiv(n, nt), 8)
    np_ = nt * tn
    mt = pl.cdiv(m, m_tile_cap)
    tm = _round_up(pl.cdiv(m, mt), 128)
    mp_ = mt * tm

    p1 = points1.astype(jnp.float32)                         # (B, N, 3)
    if np_ != n:
        p1 = jnp.pad(p1, ((0, 0), (0, np_ - n), (0, 0)),
                     constant_values=_PAD_COORD)
    p2t = jnp.swapaxes(points2.astype(jnp.float32), 1, 2)    # (B, 3, M), lane-dense
    if mp_ != m:
        p2t = jnp.pad(p2t, ((0, 0), (0, 0), (0, mp_ - m)),
                      constant_values=_PAD_COORD)

    # Static in-kernel lane chunking of the m-tile (bounds live temporaries).
    ch = min(tm, 512)
    chunks = []
    off = 0
    while off < tm:
        clen = min(ch, tm - off)
        chunks.append((off, clen))
        off += clen
    chunks = tuple(chunks)

    kern = functools.partial(
        _chamfer_kernel, w1=float(w1), w2=float(w2),
        n_true=n, m_true=m, tn=tn, tm=tm, chunks=chunks,
        pad_n=(np_ != n), pad_m=(mp_ != m))

    cost = pl.CostEstimate(
        flops=int(9 * b * n * m),
        transcendentals=0,
        bytes_accessed=int(4 * (b * n * 3 + b * m * 3 + b)))

    out = pl.pallas_call(
        kern,
        out_shape=jax.ShapeDtypeStruct((b, 1, 1), jnp.float32),
        grid_spec=pltpu.PrefetchScalarGridSpec(
            num_scalar_prefetch=0,
            grid=(b, nt, mt),
            in_specs=[
                pl.BlockSpec((1, tn, 3), lambda bi, ni, mi: (bi, ni, 0)),
                pl.BlockSpec((1, 3, tm), lambda bi, ni, mi: (bi, 0, mi)),
            ],
            out_specs=pl.BlockSpec((1, 1, 1), lambda bi, ni, mi: (bi, 0, 0)),
            scratch_shapes=[
                pltpu.VMEM((tn, 128), jnp.float32),    # running per-lane row mins
                pltpu.VMEM((mt, 1, tm), jnp.float32),  # running col mins per m-tile
                pltpu.VMEM((1, 1), jnp.float32),       # loss1 sum
                pltpu.VMEM((1, 1), jnp.float32),       # loss2 sum
            ],
        ),
        compiler_params=pltpu.CompilerParams(
            # batch axis parallel (2 TCs on v7x); n & m carry accumulators.
            dimension_semantics=("parallel", "arbitrary", "arbitrary"),
            vmem_limit_bytes=32 * 1024 * 1024,
        ),
        cost_estimate=cost,
    )(p1, p2t)

    loss_b = out[:, 0, 0]                 # (B,)
    if each_batch:
        return loss_b
    return jnp.mean(loss_b)


def _chamfer_reference(points1, points2, w1=1.0, w2=1.0, each_batch=False):
    diff = points1[:, :, None, :] - points2[:, None, :, :]
    dist = jnp.sum(diff * diff, axis=3)
    dmin1 = jnp.min(dist, axis=2)
    dmin2 = jnp.min(dist, axis=1)
    loss = w1 * jnp.mean(dmin1, axis=1) + w2 * jnp.mean(dmin2, axis=1)
    if not each_batch:
        loss = jnp.mean(loss)
    return loss


if __name__ == "__main__":
    key = jax.random.PRNGKey(0)
    k1, k2, k3, k4 = jax.random.split(key, 4)

    # Case 1: small clouds (single tile; M padded/masked to 128 lanes).
    B, N, M = 2, 16, 12
    pts1 = jax.random.normal(k1, (B, N, 3), dtype=jnp.float32)
    pts2 = jax.random.normal(k2, (B, M, 3), dtype=jnp.float32)

    loss = jax.block_until_ready(chamfer_distance_loss(pts1, pts2, 1.0, 1.0))
    ref = _chamfer_reference(pts1, pts2, 1.0, 1.0)
    assert jnp.allclose(loss, ref, rtol=2e-4, atol=2e-5), (loss, ref)

    loss_b = jax.block_until_ready(
        chamfer_distance_loss(pts1, pts2, 0.5, 2.0, each_batch=True))
    ref_b = _chamfer_reference(pts1, pts2, 0.5, 2.0, each_batch=True)
    assert jnp.allclose(loss_b, ref_b, rtol=2e-4, atol=2e-5), (loss_b, ref_b)

    # Case 2: ragged edges; exercise the multi-tile grid path with small tile
    # caps (keeps test shapes small), then the default big-tile path (which
    # also exercises the ragged in-kernel lane chunking, 512 + 128).
    B2, N2, M2 = 2, 300, 530
    pts1b = jax.random.normal(k3, (B2, N2, 3), dtype=jnp.float32)
    pts2b = jax.random.normal(k4, (B2, M2, 3), dtype=jnp.float32)
    ref2 = _chamfer_reference(pts1b, pts2b, 1.0, 1.0, each_batch=True)

    loss2_multi = jax.block_until_ready(
        chamfer_distance_loss(pts1b, pts2b, 1.0, 1.0, each_batch=True,
                              n_tile_cap=64, m_tile_cap=256))
    assert jnp.allclose(loss2_multi, ref2, rtol=2e-4, atol=2e-5), (loss2_multi, ref2)

    loss2_big = jax.block_until_ready(
        chamfer_distance_loss(pts1b, pts2b, 1.0, 1.0, each_batch=True))
    assert jnp.allclose(loss2_big, ref2, rtol=2e-4, atol=2e-5), (loss2_big, ref2)

    print("KERNEL_OK")
</pallas_src>

<mosaic_0001>
module attributes {stable_mosaic.version = 11 : i64} {
  func.func @_chamfer_kernel(%arg0: i32, %arg1: i32, %arg2: i32, %arg3: memref<1x16x3xf32, #tpu.memory_space<vmem>>, %arg4: memref<1x3x128xf32, #tpu.memory_space<vmem>>, %arg5: memref<1x1x1xf32, #tpu.memory_space<vmem>>, %arg6: memref<16x128xf32, #tpu.memory_space<vmem>>, %arg7: memref<1x1x128xf32, #tpu.memory_space<vmem>>, %arg8: memref<1x1xf32, #tpu.memory_space<vmem>>, %arg9: memref<1x1xf32, #tpu.memory_space<vmem>>) attributes {dimension_semantics = [#tpu.dimension_semantics<parallel>, #tpu.dimension_semantics<arbitrary>, #tpu.dimension_semantics<arbitrary>], iteration_bounds = array<i64: 2, 1, 1>, scalar_prefetch = 0 : i64, scratch_operands = 4 : i64, tpu.core_type = #tpu.core_type<tc>, window_params = [{transform_indices = @transform_0, window_bounds = array<i64: 1, 16, 3>}, {transform_indices = @transform_1, window_bounds = array<i64: 1, 3, 128>}, {transform_indices = @transform_2, window_bounds = array<i64: 1, 1, 1>}]} {
    %c0_i32 = arith.constant 0 : i32
    %0 = arith.cmpi eq, %arg1, %c0_i32 : i32
    %c0_i32_0 = arith.constant 0 : i32
    %1 = arith.cmpi eq, %arg2, %c0_i32_0 : i32
    %2 = arith.andi %0, %1 : i1
    %3 = arith.extui %2 : i1 to i32
    %c0_i32_1 = arith.constant 0 : i32
    %4 = arith.cmpi ne, %3, %c0_i32_1 : i32
    scf.if %4 {
      %cst_24 = arith.constant 0.000000e+00 : f32
      %57 = vector.broadcast %cst_24 : f32 to vector<1x1xf32>
      %c0_25 = arith.constant 0 : index
      %c0_26 = arith.constant 0 : index
      %58 = vector.load %arg8[%c0_25, %c0_26] : memref<1x1xf32, #tpu.memory_space<vmem>>, vector<1x1xf32>
      tpu.vector_store %arg8[%c0_25, %c0_26], %57 {strides = array<i32>} : memref<1x1xf32, #tpu.memory_space<vmem>>, vector<1x1xf32>,
      %cst_27 = arith.constant 0.000000e+00 : f32
      %59 = vector.broadcast %cst_27 : f32 to vector<1x1xf32>
      %c0_28 = arith.constant 0 : index
      %c0_29 = arith.constant 0 : index
      %60 = vector.load %arg9[%c0_28, %c0_29] : memref<1x1xf32, #tpu.memory_space<vmem>>, vector<1x1xf32>
      tpu.vector_store %arg9[%c0_28, %c0_29], %59 {strides = array<i32>} : memref<1x1xf32, #tpu.memory_space<vmem>>, vector<1x1xf32>,
    } else {
    }
    %c0 = arith.constant 0 : index
    %c0_2 = arith.constant 0 : index
    %c0_3 = arith.constant 0 : index
    %5 = vector.load %arg3[%c0, %c0_2, %c0_3] : memref<1x16x3xf32, #tpu.memory_space<vmem>>, vector<1x16x3xf32>
    %6 = vector.shape_cast %5 : vector<1x16x3xf32> to vector<16x3xf32>
    %c0_4 = arith.constant 0 : index
    %c0_5 = arith.constant 0 : index
    %c0_6 = arith.constant 0 : index
    %7 = vector.load %arg4[%c0_4, %c0_5, %c0_6] : memref<1x3x128xf32, #tpu.memory_space<vmem>>, vector<1x3x128xf32>
    %8 = vector.shape_cast %7 : vector<1x3x128xf32> to vector<3x128xf32>
    %9 = vector.extract_strided_slice %6 {offsets = [0, 0], sizes = [16, 1], strides = [1, 1]} : vector<16x3xf32> to vector<16x1xf32>
    %10 = vector.extract_strided_slice %6 {offsets = [0, 1], sizes = [16, 1], strides = [1, 1]} : vector<16x3xf32> to vector<16x1xf32>
    %11 = vector.extract_strided_slice %6 {offsets = [0, 2], sizes = [16, 1], strides = [1, 1]} : vector<16x3xf32> to vector<16x1xf32>
    %12 = vector.extract_strided_slice %8 {offsets = [0, 0], sizes = [1, 128], strides = [1, 1]} : vector<3x128xf32> to vector<1x128xf32>
    %13 = vector.broadcast %9 : vector<16x1xf32> to vector<16x128xf32>
    %14 = vector.broadcast %12 : vector<1x128xf32> to vector<16x128xf32>
    %15 = arith.subf %13, %14 : vector<16x128xf32>
    %16 = vector.extract_strided_slice %8 {offsets = [1, 0], sizes = [1, 128], strides = [1, 1]} : vector<3x128xf32> to vector<1x128xf32>
    %17 = vector.broadcast %10 : vector<16x1xf32> to vector<16x128xf32>
    %18 = vector.broadcast %16 : vector<1x128xf32> to vector<16x128xf32>
    %19 = arith.subf %17, %18 : vector<16x128xf32>
    %20 = vector.extract_strided_slice %8 {offsets = [2, 0], sizes = [1, 128], strides = [1, 1]} : vector<3x128xf32> to vector<1x128xf32>
    %21 = vector.broadcast %11 : vector<16x1xf32> to vector<16x128xf32>
    %22 = vector.broadcast %20 : vector<1x128xf32> to vector<16x128xf32>
    %23 = arith.subf %21, %22 : vector<16x128xf32>
    %24 = arith.mulf %15, %15 : vector<16x128xf32>
    %25 = arith.mulf %19, %19 : vector<16x128xf32>
    %26 = arith.addf %24, %25 : vector<16x128xf32>
    %27 = arith.mulf %23, %23 : vector<16x128xf32>
    %28 = arith.addf %26, %27 : vector<16x128xf32>
    %cst = arith.constant dense<0x7F800000> : vector<128xf32>
    %29 = vector.multi_reduction <minimumf>, %28, %cst [0] : vector<16x128xf32> to vector<128xf32>
    %30 = vector.shape_cast %29 : vector<128xf32> to vector<1x128xf32>
    %31 = arith.index_cast %arg2 : i32 to index
    %c0_7 = arith.constant 0 : index
    %c0_8 = arith.constant 0 : index
    %32 = vector.load %arg7[%31, %c0_7, %c0_8] : memref<1x1x128xf32, #tpu.memory_space<vmem>>, vector<1x1x128xf32>
    %33 = vector.shape_cast %32 : vector<1x1x128xf32> to vector<1x128xf32>
    %cst_9 = arith.constant 3.40282347E+38 : f32
    %34 = vector.broadcast %cst_9 : f32 to vector<1x128xf32>
    %35 = arith.select %0, %34, %33 : vector<1x128xf32>
    %36 = arith.minimumf %35, %30 : vector<1x128xf32>
    %37 = arith.index_cast %arg2 : i32 to index
    %c0_10 = arith.constant 0 : index
    %c0_11 = arith.constant 0 : index
    %38 = vector.load %arg7[%37, %c0_10, %c0_11] : memref<1x1x128xf32, #tpu.memory_space<vmem>>, vector<1x1x128xf32>
    %39 = vector.shape_cast %38 : vector<1x1x128xf32> to vector<1x128xf32>
    %40 = vector.shape_cast %36 : vector<1x128xf32> to vector<1x1x128xf32>
    tpu.vector_store %arg7[%37, %c0_10, %c0_11], %40 {strides = array<i32>} : memref<1x1x128xf32, #tpu.memory_space<vmem>>, vector<1x1x128xf32>,
    %c0_12 = arith.constant 0 : index
    %c0_13 = arith.constant 0 : index
    %41 = vector.load %arg6[%c0_12, %c0_13] : memref<16x128xf32, #tpu.memory_space<vmem>>, vector<16x128xf32>
    %cst_14 = arith.constant 3.40282347E+38 : f32
    %42 = vector.broadcast %cst_14 : f32 to vector<16x128xf32>
    %43 = arith.select %1, %42, %41 : vector<16x128xf32>
    %44 = arith.minimumf %43, %28 : vector<16x128xf32>
    %c0_15 = arith.constant 0 : index
    %c0_16 = arith.constant 0 : index
    %45 = vector.load %arg6[%c0_15, %c0_16] : memref<16x128xf32, #tpu.memory_space<vmem>>, vector<16x128xf32>
    tpu.vector_store %arg6[%c0_15, %c0_16], %44 {strides = array<i32>} : memref<16x128xf32, #tpu.memory_space<vmem>>, vector<16x128xf32>,
    %c0_i32_17 = arith.constant 0 : i32
    %46 = arith.cmpi eq, %arg2, %c0_i32_17 : i32
    %47 = arith.extui %46 : i1 to i32
    %c0_i32_18 = arith.constant 0 : i32
    %48 = arith.cmpi ne, %47, %c0_i32_18 : i32
    scf.if %48 {
      %c0_24 = arith.constant 0 : index
      %c0_25 = arith.constant 0 : index
      %57 = vector.load %arg6[%c0_24, %c0_25] : memref<16x128xf32, #tpu.memory_space<vmem>>, vector<16x128xf32>
      %cst_26 = arith.constant dense<0x7F800000> : vector<16xf32>
      %58 = vector.multi_reduction <minimumf>, %57, %cst_26 [1] : vector<16x128xf32> to vector<16xf32>
      %59 = vector.shape_cast %58 : vector<16xf32> to vector<16x1xf32>
      %c0_27 = arith.constant 0 : index
      %c0_28 = arith.constant 0 : index
      %60 = vector.load %arg8[%c0_27, %c0_28] : memref<1x1xf32, #tpu.memory_space<vmem>>, vector<1x1xf32>
      %cst_29 = arith.constant dense<0.000000e+00> : vector<1xf32>
      %61 = vector.multi_reduction <add>, %59, %cst_29 [0] : vector<16x1xf32> to vector<1xf32>
      %62 = vector.shape_cast %61 : vector<1xf32> to vector<1x1xf32>
      %63 = arith.addf %60, %62 : vector<1x1xf32>
      %c0_30 = arith.constant 0 : index
      %c0_31 = arith.constant 0 : index
      %64 = vector.load %arg8[%c0_30, %c0_31] : memref<1x1xf32, #tpu.memory_space<vmem>>, vector<1x1xf32>
      tpu.vector_store %arg8[%c0_30, %c0_31], %63 {strides = array<i32>} : memref<1x1xf32, #tpu.memory_space<vmem>>, vector<1x1xf32>,
    } else {
    }
    %c0_i32_19 = arith.constant 0 : i32
    %49 = arith.cmpi eq, %arg1, %c0_i32_19 : i32
    %50 = arith.extui %49 : i1 to i32
    %c0_i32_20 = arith.constant 0 : i32
    %51 = arith.cmpi ne, %50, %c0_i32_20 : i32
    scf.if %51 {
      %57 = arith.index_cast %arg2 : i32 to index
      %c0_24 = arith.constant 0 : index
      %c0_25 = arith.constant 0 : index
      %58 = vector.load %arg7[%57, %c0_24, %c0_25] : memref<1x1x128xf32, #tpu.memory_space<vmem>>, vector<1x1x128xf32>
      %59 = vector.shape_cast %58 : vector<1x1x128xf32> to vector<1x128xf32>
      %c128_i32 = arith.constant 128 : i32
      %60 = arith.muli %arg2, %c128_i32 : i32
      %61 = tpu.iota {dimensions = array<i32: 1>} : vector<1x128xi32>
      %62 = vector.broadcast %60 : i32 to vector<1x128xi32>
      %63 = arith.addi %62, %61 : vector<1x128xi32>
      %c12_i32 = arith.constant 12 : i32
      %64 = vector.broadcast %c12_i32 : i32 to vector<1x128xi32>
      %65 = arith.cmpi slt, %63, %64 : vector<1x128xi32>
      %cst_26 = arith.constant 0.000000e+00 : f32
      %66 = vector.broadcast %cst_26 : f32 to vector<1x128xf32>
      %67 = arith.select %65, %59, %66 : vector<1x128xi1>, vector<1x128xf32>
      %c0_27 = arith.constant 0 : index
      %c0_28 = arith.constant 0 : index
      %68 = vector.load %arg9[%c0_27, %c0_28] : memref<1x1xf32, #tpu.memory_space<vmem>>, vector<1x1xf32>
      %cst_29 = arith.constant dense<0.000000e+00> : vector<1xf32>
      %69 = vector.multi_reduction <add>, %67, %cst_29 [1] : vector<1x128xf32> to vector<1xf32>
      %70 = vector.shape_cast %69 : vector<1xf32> to vector<1x1xf32>
      %71 = arith.addf %68, %70 : vector<1x1xf32>
      %c0_30 = arith.constant 0 : index
      %c0_31 = arith.constant 0 : index
      %72 = vector.load %arg9[%c0_30, %c0_31] : memref<1x1xf32, #tpu.memory_space<vmem>>, vector<1x1xf32>
      tpu.vector_store %arg9[%c0_30, %c0_31], %71 {strides = array<i32>} : memref<1x1xf32, #tpu.memory_space<vmem>>, vector<1x1xf32>,
    } else {
    }
    %c0_i32_21 = arith.constant 0 : i32
    %52 = arith.cmpi eq, %arg1, %c0_i32_21 : i32
    %c0_i32_22 = arith.constant 0 : i32
    %53 = arith.cmpi eq, %arg2, %c0_i32_22 : i32
    %54 = arith.andi %52, %53 : i1
    %55 = arith.extui %54 : i1 to i32
    %c0_i32_23 = arith.constant 0 : i32
    %56 = arith.cmpi ne, %55, %c0_i32_23 : i32
    scf.if %56 {
      %c0_24 = arith.constant 0 : index
      %c0_25 = arith.constant 0 : index
      %57 = vector.load %arg8[%c0_24, %c0_25] : memref<1x1xf32, #tpu.memory_space<vmem>>, vector<1x1xf32>
      %cst_26 = arith.constant 6.250000e-02 : f32
      %58 = vector.broadcast %cst_26 : f32 to vector<1x1xf32>
      %59 = arith.mulf %58, %57 : vector<1x1xf32>
      %c0_27 = arith.constant 0 : index
      %c0_28 = arith.constant 0 : index
      %60 = vector.load %arg9[%c0_27, %c0_28] : memref<1x1xf32, #tpu.memory_space<vmem>>, vector<1x1xf32>
      %cst_29 = arith.constant 0.0833333358 : f32
      %61 = vector.broadcast %cst_29 : f32 to vector<1x1xf32>
      %62 = arith.mulf %61, %60 : vector<1x1xf32>
      %63 = arith.addf %59, %62 : vector<1x1xf32>
      %64 = vector.shape_cast %63 : vector<1x1xf32> to vector<1x1x1xf32>
      %c0_30 = arith.constant 0 : index
      %c0_31 = arith.constant 0 : index
      %c0_32 = arith.constant 0 : index
      %65 = vector.load %arg5[%c0_30, %c0_31, %c0_32] : memref<1x1x1xf32, #tpu.memory_space<vmem>>, vector<1x1x1xf32>
      tpu.vector_store %arg5[%c0_30, %c0_31, %c0_32], %64 {strides = array<i32>} : memref<1x1x1xf32, #tpu.memory_space<vmem>>, vector<1x1x1xf32>,
    } else {
    }
    return
  }
  func.func @transform_0(%arg0: i32, %arg1: i32, %arg2: i32) -> (i32, i32, i32) {
    %c0_i32 = arith.constant 0 : i32
    %c0_i32_0 = arith.constant 0 : i32
    return %arg0, %arg1, %c0_i32 : i32, i32, i32
  }
  func.func @transform_1(%arg0: i32, %arg1: i32, %arg2: i32) -> (i32, i32, i32) {
    %c0_i32 = arith.constant 0 : i32
    %c0_i32_0 = arith.constant 0 : i32
    return %arg0, %c0_i32, %arg2 : i32, i32, i32
  }
  func.func @transform_2(%arg0: i32, %arg1: i32, %arg2: i32) -> (i32, i32, i32) {
    %c0_i32 = arith.constant 0 : i32
    %c0_i32_0 = arith.constant 0 : i32
    %c0_i32_1 = arith.constant 0 : i32
    return %arg0, %c0_i32, %c0_i32_0 : i32, i32, i32
  }
}

</mosaic_0001>

<llo_original>
// kernel: tpu_custom_call.1
$region0: #{tpu_custom_call.1}
  #allocation0 [shape = 'u32[]', space=smem, size = 0x4, offset = 0x4, fixed_abs, tag = 'smem constant byte address 0x4 - core index']
  #allocation1 [shape = 'u32[144,128]{1,0:T(1,128)}', space=vmem, size = 0x12000, scoped, tag = 'internal scratch']
  #allocation2 [shape = 'f32[16,128]{1,0:T(8,128)}', space=vmem, size = 0x2000, scoped, tag = 'scratch operand']
  #allocation3 [shape = 'f32[1,1,128]{2,1,0:T(1,128)}', space=vmem, size = 0x200, scoped, tag = 'scratch operand']
  #allocation4 [shape = 'f32[1,1]{1,0:T(1,128)}', space=vmem, size = 0x200, scoped, tag = 'scratch operand']
  #allocation5 [shape = 'f32[1,1]{1,0:T(1,128)}', space=vmem, size = 0x200, scoped, tag = 'scratch operand']
  %s0 = inlined_call_operand.vmem [shape: f32[2,16,3], index: 0, kind: input, shape index: {}]
  %s1 = inlined_call_operand.vmem [shape: f32[2,3,128], index: 1, kind: input, shape index: {}]
  %s2 = inlined_call_operand.vmem [shape: f32[2,1,1], index: 2, kind: output, shape index: {}]
  %s3 = sld [smem:[#allocation0]]
  $region57: #{tpu_custom_call.1} parent=0
    _
  %s5 = ssub.s32 1, %s3
  %s6 = scalar_select 0, %s5, %s3
  loop: start=0, step=1, limit=4
  $region2: #{tpu_custom_call.1} parent=0 // loop_pre_header
    _
  $region3: #{tpu_custom_call.1} parent=0 // loop_header
    %s8 = sphi 0, %s12
    %p9 = scmp.ge.s32.totalorder %s8, 4
    %s15 = sphi 0, %s34
    %s16 = sphi 0, %s30
    %s17 = sphi 0, %s26
    %s18 = sphi 0, %s15
    %s19 = sphi 0, %s16
    %s20 = sphi 0, %s17
    %s21 = sphi 0, %s18
    %s22 = sphi 0, %s19
    %s23 = sphi 0, %s20
    %s39 = sphi 0, %s41
    %s42 = sphi 0, %s39
    %s43 = sphi 0, %s42
    %s59 = sphi 0, %s43
    %s67 = sphi 0, %s69
    %s70 = sphi 0, %s67
    %s71 = sphi 0, %s70
    %s87 = sphi 0, %s71
    %s93 = sphi 0, %s95
    %s96 = sphi 0, %s93
    %s97 = sphi 0, %s96
    %s113 = sphi 0, %s97
  $region4: #{tpu_custom_call.1} parent=0 // loop_header_branch
    %11 = sbr.rel (%p9) target = $region8
  $region5: #{tpu_custom_call.1} parent=0 // loop_body
    %s13 = ssub.s32 %s8, 1
    %s14 = ssub.s32 %s8, 2
    %s24 = sadd.s32 1, %s17
    %p25 = scmp.ge.s32.totalorder %s24, 1
    %s26 = scalar_select %p25, 0, %s24
    %s27 = sadd.s32 1, %s16
    %s28 = scalar_select %p25, %s27, %s16
    %p29 = scmp.ge.s32.totalorder %s28, 1
    %s30 = scalar_select %p29, 0, %s28
    %s31 = sadd.s32 1, %s15
    %s32 = scalar_select %p29, %s31, %s15
    %p33 = scmp.ge.s32.totalorder %s32, 2
    %s34 = scalar_select %p33, 0, %s32
    %s35 = ssub.s32 %s15, %s34
    %s36 = ssub.s32 %s16, %s30
    %s37 = sor.u32 %s35, %s36
    %p38 = scmp.eq.s32.totalorder %s37, 0
    %s40 = sadd.s32 %s39, 1
    %s41 = scalar_select %p38, %s39, %s40
    %p44 = pneg %p38
    %p45 = scmp.eq.s32.totalorder %s8, 1
    %p46 = por %p44, %p45
    %p47 = scmp.ne.s32.totalorder %s39, %s42
    %p48 = scmp.eq.s32.totalorder %s8, 0
    %p49 = por %p47, %p48
    %p50 = scmp.ne.s32.totalorder %s39, %s42
    %p51 = scmp.eq.s32.totalorder %s13, 1
    %p52 = por %p50, %p51
    %p53 = scmp.ne.s32.totalorder %s42, %s43
    %p54 = scmp.eq.s32.totalorder %s13, 0
    %p55 = por %p53, %p54
    %p56 = scmp.ne.s32.totalorder %s42, %s43
    %p57 = scmp.eq.s32.totalorder %s14, 1
    %p58 = por %p56, %p57
    %p60 = scmp.ne.s32.totalorder %s43, %s59
    %p61 = scmp.eq.s32.totalorder %s14, 0
    %p62 = por %p60, %p61
    %s63 = ssub.s32 %s15, %s34
    %s64 = ssub.s32 %s17, %s26
    %s65 = sor.u32 %s63, %s64
    %p66 = scmp.eq.s32.totalorder %s65, 0
    %s68 = sadd.s32 %s67, 1
    %s69 = scalar_select %p66, %s67, %s68
    %p72 = pneg %p66
    %p73 = scmp.eq.s32.totalorder %s8, 1
    %p74 = por %p72, %p73
    %p75 = scmp.ne.s32.totalorder %s67, %s70
    %p76 = scmp.eq.s32.totalorder %s8, 0
    %p77 = por %p75, %p76
    %p78 = scmp.ne.s32.totalorder %s67, %s70
    %p79 = scmp.eq.s32.totalorder %s13, 1
    %p80 = por %p78, %p79
    %p81 = scmp.ne.s32.totalorder %s70, %s71
    %p82 = scmp.eq.s32.totalorder %s13, 0
    %p83 = por %p81, %p82
    %p84 = scmp.ne.s32.totalorder %s70, %s71
    %p85 = scmp.eq.s32.totalorder %s14, 1
    %p86 = por %p84, %p85
    %p88 = scmp.ne.s32.totalorder %s71, %s87
    %p89 = scmp.eq.s32.totalorder %s14, 0
    %p90 = por %p88, %p89
    %s91 = ssub.s32 %s15, %s34
    %p92 = scmp.eq.s32.totalorder %s91, 0
    %s94 = sadd.s32 %s93, 1
    %s95 = scalar_select %p92, %s93, %s94
    %p98 = pneg %p92
    %p99 = scmp.eq.s32.totalorder %s8, 1
    %p100 = por %p98, %p99
    %p101 = scmp.ne.s32.totalorder %s93, %s96
    %p102 = scmp.eq.s32.totalorder %s8, 0
    %p103 = por %p101, %p102
    %p104 = scmp.ne.s32.totalorder %s93, %s96
    %p105 = scmp.eq.s32.totalorder %s13, 1
    %p106 = por %p104, %p105
    %p107 = scmp.ne.s32.totalorder %s96, %s97
    %p108 = scmp.eq.s32.totalorder %s13, 0
    %p109 = por %p107, %p108
    %p110 = scmp.ne.s32.totalorder %s96, %s97
    %p111 = scmp.eq.s32.totalorder %s14, 1
    %p112 = por %p110, %p111
    %p114 = scmp.ne.s32.totalorder %s97, %s113
    %p115 = scmp.eq.s32.totalorder %s14, 0
    %p116 = por %p114, %p115
    %p117 = scmp.le.s32.totalorder 1, %s8
    %p118 = scmp.lt.s32.totalorder %s8, 3
    %p119 = pnand %p117, %p118
    %p120 = pneg %p119
    // Predicated region
    $region9: #{tpu_custom_call.1} parent=5 // pred_check
      _
    $region10: #{tpu_custom_call.1} parent=5 // pred_check_branch
      %122 = sbr.rel (%p119) target = $region12
    $region11: #{tpu_custom_call.1} parent=5 // pred_region
      %s123 = ssub.s32 %s8, 1
    $region12: #{tpu_custom_call.1} parent=5 // pred_fallthru
      _
    %p124 = scmp.lt.s32.totalorder %s8, 2
    // Predicated region
    $region13: #{tpu_custom_call.1} parent=5 // pred_check
      %p125 = pneg %p124
    $region14: #{tpu_custom_call.1} parent=5 // pred_check_branch
      %127 = sbr.rel (%p125) target = $region16
    $region15: #{tpu_custom_call.1} parent=5 // pred_region
      // Predicated region
      $region17: #{tpu_custom_call.1} parent=15 // pred_check
        %p128 = pneg %p49
      $region18: #{tpu_custom_call.1} parent=15 // pred_check_branch
        %130 = sbr.rel (%p128) target = $region20
      $region19: #{tpu_custom_call.1} parent=15 // pred_region
        %s131 = smul.u32 2, %s16
        %p132 = scmp.lt.s32.totalorder %s15, 1
        %s133 = scalar_select %p132, %s15, 1
        %p134 = scmp.lt.s32.totalorder %s131, 1
        %s135 = scalar_select %p134, %s131, 1
        %s136 = smul.addr %s133, 2
        %s137 = sadd.s32 %s135, %s136
        %s138 = smul.addr %s137, 8
        %s139 = scalar_lea.vmem %s0, %s138
        %s140 = smul.u32 2, %s16
      $region20: #{tpu_custom_call.1} parent=15 // pred_fallthru
        _
      // Predicated region
      $region21: #{tpu_custom_call.1} parent=15 // pred_check
        %p141 = pneg %p77
      $region22: #{tpu_custom_call.1} parent=15 // pred_check_branch
        %143 = sbr.rel (%p141) target = $region24
      $region23: #{tpu_custom_call.1} parent=15 // pred_region
        %p144 = scmp.lt.s32.totalorder %s15, 1
        %s145 = scalar_select %p144, %s15, 1
        %p146 = scmp.lt.s32.totalorder %s17, 0
        %s147 = scalar_select %p146, %s17, 0
        %s148 = sadd.s32 %s147, %s145
        %s149 = smul.addr %s148, 4
        %s150 = scalar_lea.vmem %s1, %s149
      $region24: #{tpu_custom_call.1} parent=15 // pred_fallthru
        _
    $region16: #{tpu_custom_call.1} parent=5 // pred_fallthru
      _
    %p151 = scmp.le.s32.totalorder 1, %s8
    %p152 = scmp.lt.s32.totalorder %s8, 3
    %p153 = pnand %p151, %p152
    %p154 = pneg %p153
    // Predicated region
    $region25: #{tpu_custom_call.1} parent=5 // pred_check
      _
    $region26: #{tpu_custom_call.1} parent=5 // pred_check_branch
      %156 = sbr.rel (%p153) target = $region28
    $region27: #{tpu_custom_call.1} parent=5 // pred_region
      %s157 = ssub.s32 %s8, 1
      %s158 = smul.u32 2, %s19
      %p159 = scmp.lt.s32.totalorder %s18, 1
      %s160 = scalar_select %p159, %s18, 1
      %p161 = scmp.lt.s32.totalorder %s158, 1
      %s162 = scalar_select %p161, %s158, 1
      %s163 = smul.addr %s160, 2
      %s164 = sadd.s32 %s162, %s163
      %s165 = smul.addr %s164, 8
      %s166 = scalar_lea.vmem %s0, %s165
      %p167 = pneg %p55
      %p168 = pneg %p52
      %p169 = scmp.lt.s32.totalorder %s18, 1
      %s170 = scalar_select %p169, %s18, 1
      %p171 = scmp.lt.s32.totalorder %s20, 0
      %s172 = scalar_select %p171, %s20, 0
      %s173 = sadd.s32 %s172, %s170
      %s174 = smul.addr %s173, 4
      %s175 = scalar_lea.vmem %s1, %s174
      %p176 = pneg %p83
      %p177 = pneg %p80
      %p178 = pneg %p109
      %p179 = pneg %p106
      %p180 = scmp.lt.s32.totalorder %s18, 1
      %s181 = scalar_select %p180, %s18, 1
      %s182 = scalar_lea.vmem %s2, %s181
      %s183 = smul.u32 2, %s19
      %p184 = scmp.lt.s32.totalorder %s18, 1
      %s185 = scalar_select %p184, %s18, 1
      %p186 = scmp.lt.s32.totalorder %s183, 1
      %s187 = scalar_select %p186, %s183, 1
      %s188 = smul.addr %s185, 2
      %s189 = sadd.s32 %s187, %s188
      %s190 = smul.addr %s189, 8
      %s191 = scalar_lea.vmem %s0, %s190
      %s192 = smul.u32 2, %s19
      %p193 = scmp.lt.s32.totalorder %s18, 1
      %s194 = scalar_select %p193, %s18, 1
      %p195 = scmp.lt.s32.totalorder %s20, 0
      %s196 = scalar_select %p195, %s20, 0
      %s197 = sadd.s32 %s196, %s194
      %s198 = smul.addr %s197, 4
      %s199 = scalar_lea.vmem %s1, %s198
      %p200 = scmp.lt.s32.totalorder %s18, 1
      %s201 = scalar_select %p200, %s18, 1
      %s202 = scalar_lea.vmem %s2, %s201
      %p203 = scmp.eq.s32.totalorder %s19, 0
      %p204 = scmp.eq.s32.totalorder %s20, 0
      %p205 = pnand %p203, %p204
      %p206 = pneg %p205
      // Predicated region
      $region29: #{tpu_custom_call.1} parent=27 // pred_check
        _
      $region30: #{tpu_custom_call.1} parent=27 // pred_check_branch
        %208 = sbr.rel (%p205) target = $region32
      $region31: #{tpu_custom_call.1} parent=27 // pred_region
        %vm209 = vcmask 0
        %210 = vst.msk [vmem:[#allocation4] sm:$0x1] %vm209, 0.0
        %211 = vst.msk [vmem:[#allocation5] sm:$0x1] %vm209, 0.0
      $region32: #{tpu_custom_call.1} parent=27 // pred_fallthru
        _
      %v212 = vld [vmem:[%s191] sm:$0xff]
      %v213 = vld [vmem:[%s191 + $0x8] sm:$0xff]
      %v214 = vld [vmem:[%s199] sm:$0x7]
      %216 = vset.pattern.permute.xlu0 0
      %217 = vperm.xlu0 %216, %v212
      %v218 = vpop.permute.xlu0 %217
      %221 = vset.pattern.permute.xlu0 0
      %222 = vperm.xlu0 %221, %v213
      %v223 = vpop.permute.xlu0 %222
      %v225 = vlaneseq
      %v226 = vshrl.u32 %v225, 7
      %v227 = vsub.s32 0, %v226
      %v228 = vrot.slane %v214, %v227
      %v229 = vsub.f32 %v218, %v228
      %v230 = vsub.f32 %v223, %v228
      %231 = vset.pattern.permute.xlu0 1
      %232 = vperm.xlu0 %231, %v212
      %v233 = vpop.permute.xlu0 %232
      %235 = vset.pattern.permute.xlu0 1
      %236 = vperm.xlu0 %235, %v213
      %v237 = vpop.permute.xlu0 %236
      %v239 = vlaneseq
      %v240 = vshrl.u32 %v239, 7
      %v241 = vsub.s32 1, %v240
      %v242 = vrot.slane %v214, %v241
      %v243 = vsub.f32 %v233, %v242
      %v244 = vsub.f32 %v237, %v242
      %245 = vset.pattern.permute.xlu0 2
      %246 = vperm.xlu0 %245, %v212
      %v247 = vpop.permute.xlu0 %246
      %249 = vset.pattern.permute.xlu0 2
      %250 = vperm.xlu0 %249, %v213
      %v251 = vpop.permute.xlu0 %250
      %v253 = vlaneseq
      %v254 = vshrl.u32 %v253, 7
      %v255 = vsub.s32 2, %v254
      %v256 = vrot.slane %v214, %v255
      %v257 = vsub.f32 %v247, %v256
      %v258 = vsub.f32 %v251, %v256
      %v259 = vmul.f32 %v229, %v229
      %v260 = vmul.f32 %v230, %v230
      %v261 = vmul.f32 %v243, %v243
      %v262 = vmul.f32 %v244, %v244
      %v263 = vadd.f32 %v259, %v261
      %v264 = vadd.f32 %v260, %v262
      %v265 = vmul.f32 %v257, %v257
      %v266 = vmul.f32 %v258, %v258
      %v267 = vadd.f32 %v263, %v265
      %v268 = vadd.f32 %v264, %v266
      %v269 = vmin.f32 %v267, %v268
      %v270 = vrot.slane %v269, 4
      %v271 = vmin.f32 %v269, %v270
      %v272 = vrot.slane %v271, 2
      %v273 = vmin.f32 %v271, %v272
      %v274 = vrot.slane %v273, 1
      %v275 = vmin.f32 %v273, %v274
      %s276 = scalar_lea.vmem [#allocation3], %s20
      %v277 = vld [vmem:[%s276] sm:$0x1]
      %s278 = scalar_select %p203, 1, 0
      %v279 = vstv %s278
      %vm280 = vcmp.eq.s32.totalorder %v279, 1
      %v281 = vsel %vm280, 3.4028235e+38, %v277
      %v282 = vmin.f32 %v281, %v275
      %283 = vst [vmem:[%s276] sm:$0x1] %v282
      %v284 = vld [vmem:[#allocation2] sm:$0xff]
      %v285 = vld [vmem:[#allocation2 + $0x8] sm:$0xff]
      %s286 = scalar_select %p204, 1, 0
      %v287 = vstv %s286
      %vm288 = vcmp.eq.s32.totalorder %v287, 1
      %v289 = vsel %vm288, 3.4028235e+38, %v284
      %v290 = vsel %vm288, 3.4028235e+38, %v285
      %v291 = vmin.f32 %v289, %v267
      %v292 = vmin.f32 %v290, %v268
      %293 = vst [vmem:[#allocation2] sm:$0xff] %v291
      %294 = vst [vmem:[#allocation2 + $0x8] sm:$0xff] %v292
      // Predicated region
      $region33: #{tpu_custom_call.1} parent=27 // pred_check
        %p295 = pneg %p204
      $region34: #{tpu_custom_call.1} parent=27 // pred_check_branch
        %297 = sbr.rel (%p295) target = $region36
      $region35: #{tpu_custom_call.1} parent=27 // pred_region
        %v298 = vld [vmem:[#allocation2] sm:$0xff]
        %v299 = vld [vmem:[#allocation2 + $0x8] sm:$0xff]
        %300 = vmin.xlane.f32.xlu0 %v298
        %v301 = vpop.xlane.xlu0 %300
        %302 = vmin.xlane.f32.xlu0 %v299
        %v303 = vpop.xlane.xlu0 %302
        %v304 = vld [vmem:[#allocation4] sm:$0x1]
        %v305 = vadd.f32 %v301, %v303
        %v306 = vrot.slane %v305, 4
        %v307 = vadd.f32 %v305, %v306
        %v308 = vrot.slane %v307, 2
        %v309 = vadd.f32 %v307, %v308
        %v310 = vrot.slane %v309, 1
        %v311 = vadd.f32 %v309, %v310
        %v312 = vadd.f32 %v304, %v311
        %vm313 = vcmask 0
        %314 = vst.msk [vmem:[#allocation4] sm:$0x1] %vm313, %v312
      $region36: #{tpu_custom_call.1} parent=27 // pred_fallthru
        _
      // Predicated region
      $region37: #{tpu_custom_call.1} parent=27 // pred_check
        %p315 = pneg %p203
      $region38: #{tpu_custom_call.1} parent=27 // pred_check_branch
        %317 = sbr.rel (%p315) target = $region40
      $region39: #{tpu_custom_call.1} parent=27 // pred_region
        %v318 = vld [vmem:[%s276] sm:$0x1]
        %s319 = smul.u32 %s20, 128
        %v320 = vlaneseq
        %v321 = vand.u32 %v320, 127
        %v322 = vstv %s319
        %v323 = vadd.s32 %v322, %v321
        %vm324 = vcmp.lt.s32.totalorder %v323, 12
        %v325 = vsel %vm324, %v318, 0.0
        %v326 = vld [vmem:[#allocation5] sm:$0x1]
        %vm327 = vcmask 1040384
        %v328 = vsel %vm327, %v325, 0.0
        %329 = vadd.xlane.f32.xlu0 %v328
        %v330 = vpop.xlane.xlu0 %329
        %v331 = vadd.f32 %v326, %v330
        %vm332 = vcmask 0
        %333 = vst.msk [vmem:[#allocation5] sm:$0x1] %vm332, %v331
      $region40: #{tpu_custom_call.1} parent=27 // pred_fallthru
        _
      // Predicated region
      $region41: #{tpu_custom_call.1} parent=27 // pred_check
        _
      $region42: #{tpu_custom_call.1} parent=27 // pred_check_branch
        %335 = sbr.rel (%p205) target = $region44
      $region43: #{tpu_custom_call.1} parent=27 // pred_region
        %v336 = vld [vmem:[#allocation4] sm:$0x1]
        %v337 = vmul.f32 %v336, 0.0625
        %v338 = vld [vmem:[#allocation5] sm:$0x1]
        %v339 = vmul.f32 %v338, 0.083333336
        %v340 = vadd.f32 %v337, %v339
        %vm341 = vcmask 0
        %342 = vst.msk [vmem:[%s202] sm:$0x1] %vm341, %v340
      $region44: #{tpu_custom_call.1} parent=27 // pred_fallthru
        _
      %p343 = scmp.lt.s32.totalorder %s18, 1
      %s344 = scalar_select %p343, %s18, 1
      %s345 = scalar_lea.vmem %s2, %s344
      // Predicated region
      $region45: #{tpu_custom_call.1} parent=27 // pred_check
        %p346 = pneg %p106
      $region46: #{tpu_custom_call.1} parent=27 // pred_check_branch
        %348 = sbr.rel (%p346) target = $region48
      $region47: #{tpu_custom_call.1} parent=27 // pred_region
        _
      $region48: #{tpu_custom_call.1} parent=27 // pred_fallthru
        _
    $region28: #{tpu_custom_call.1} parent=5 // pred_fallthru
      _
    %p349 = scmp.le.s32.totalorder 2, %s8
    // Predicated region
    $region49: #{tpu_custom_call.1} parent=5 // pred_check
      %p350 = pneg %p349
    $region50: #{tpu_custom_call.1} parent=5 // pred_check_branch
      %352 = sbr.rel (%p350) target = $region52
    $region51: #{tpu_custom_call.1} parent=5 // pred_region
      %s353 = ssub.s32 %s8, 2
      // Predicated region
      $region53: #{tpu_custom_call.1} parent=51 // pred_check
        %p354 = pneg %p112
      $region54: #{tpu_custom_call.1} parent=51 // pred_check_branch
        %356 = sbr.rel (%p354) target = $region56
      $region55: #{tpu_custom_call.1} parent=51 // pred_region
        %p357 = scmp.lt.s32.totalorder %s21, 1
        %s358 = scalar_select %p357, %s21, 1
        %s359 = scalar_lea.vmem %s2, %s358
      $region56: #{tpu_custom_call.1} parent=51 // pred_fallthru
        _
    $region52: #{tpu_custom_call.1} parent=5 // pred_fallthru
      _
  $region6: #{tpu_custom_call.1} parent=0 // loop_footer
    %s12 = sadd.s32 1, %s8
  $region7: #{tpu_custom_call.1} parent=0 // loop_footer_branch
    %7 = sbr.rel target = $region3
  $region8: #{tpu_custom_call.1} parent=0 // loop_exit
    _

</llo_original>
